<compile_context>
chip_gen: v7x
topology: tpu7x:2x2x1
jax: 0.10.0
libtpu: 0.0.40
codegen_flags: <defaults>
</compile_context>

<pallas_src>
import jax
import jax.numpy as jnp
from jax.experimental import pallas as pl
from jax.experimental.pallas import tpu as pltpu


def _round_up(n: int, m: int) -> int:
    return ((n + m - 1) // m) * m


def _fused_mlp_kernel(x_ref, *refs):
    """Fused MLP body: x_ref, (w1, b1, ..., wL, bL), o_ref.

    All layers run back-to-back on the MXU with f32 accumulation; only the
    final (lane-dense, padded) logits tile is written out.
    """
    o_ref = refs[-1]
    wb_refs = refs[:-1]
    n_layers = len(wb_refs) // 2

    h = x_ref[...]
    for i in range(n_layers):
        w_ref = wb_refs[2 * i]
        b_ref = wb_refs[2 * i + 1]
        # Cast to the (bf16) weight dtype for native-rate MXU; accumulate f32.
        h = jnp.dot(
            h.astype(w_ref.dtype), w_ref[...],
            preferred_element_type=jnp.float32,
        )
        h = h + b_ref[...].astype(jnp.float32)  # (1, out) bias broadcasts
        if i != n_layers - 1:
            h = jnp.maximum(h, 0.0)  # ReLU on hidden layers only
    o_ref[...] = h.astype(o_ref.dtype)


def _pad_params(params):
    """Zero-pad every layer's feature dims to multiples of 128 (lane-dense)."""
    padded = []
    for w, b in params:
        d_in, d_out = w.shape
        d_in_p, d_out_p = _round_up(d_in, 128), _round_up(d_out, 128)
        w_p = jnp.zeros((d_in_p, d_out_p), w.dtype).at[:d_in, :d_out].set(w)
        b_p = jnp.zeros((1, d_out_p), b.dtype).at[:, :d_out].set(b)
        padded.append((w_p, b_p))
    return padded


def _choose_batch_tiling(B: int, target_tm: int = 256):
    """Pick (b_pad, tm, grid) — sublane-aligned, minimal padding waste."""
    b_pad = max(8, _round_up(B, 8))
    if b_pad <= target_tm:
        tm = b_pad
    else:
        tm = 8  # fallback: no waste (b_pad is a multiple of 8)
        max_waste = max(8, b_pad // 8)  # allow <=12.5% padded rows
        for cand in range(target_tm, 7, -8):
            if _round_up(b_pad, cand) - b_pad <= max_waste:
                tm = cand
                break
        b_pad = _round_up(b_pad, tm)
    # v7x: guarantee >=2 grid steps when feasible so the "parallel" batch axis
    # can shard across both TensorCores (harmless on v5e/v6e single-TC chips).
    if b_pad == tm and tm >= 16 and tm % 16 == 0:
        tm //= 2
    return b_pad, tm, (b_pad // tm,)


def fused_mlp_pallas(x, params, out_dtype=jnp.float32):
    """Run the whole (padded) MLP in one pallas_call.

    x: (B, D_in) flattened input; params: list of ((in, out) weight, (1, out)
    bias), unpadded (bf16 recommended). Returns (B, out_features) logits.
    """
    B, d_in = x.shape
    out_features = params[-1][0].shape[1]

    padded_params = _pad_params(params)
    param_dtype = padded_params[0][0].dtype
    d_in_p = padded_params[0][0].shape[0]
    d_out_p = padded_params[-1][0].shape[1]

    b_pad, tm, grid = _choose_batch_tiling(B)

    # Pad batch/features and cast the input ONCE here (no per-tile VPU cast).
    x_p = jnp.zeros((b_pad, d_in_p), param_dtype).at[:B, :d_in].set(
        x.astype(param_dtype))

    # BlockSpecs: batch-tiled activations; weights/biases full-block,
    # VMEM-resident across batch tiles (constant index_map) and SINGLE-buffered.
    in_specs = [pl.BlockSpec((tm, d_in_p), lambda i: (i, 0))]
    flat_wb = []
    for w_p, b_p in padded_params:
        in_specs.append(pl.BlockSpec(w_p.shape, lambda i: (0, 0),
                                     pipeline_mode=pl.Buffered(1)))
        in_specs.append(pl.BlockSpec(b_p.shape, lambda i: (0, 0),
                                     pipeline_mode=pl.Buffered(1)))
        flat_wb.extend((w_p, b_p))

    # Explicit VMEM budget (v5e scoped default is 16 MiB; v7x physical 64 MiB).
    d_max = max([d_in_p] + [w_p.shape[1] for w_p, _ in padded_params])
    weight_bytes = sum(w_p.size * w_p.dtype.itemsize + b_p.size * b_p.dtype.itemsize
                       for w_p, b_p in padded_params)
    act_bytes = (2 * tm * d_in_p * x_p.dtype.itemsize            # in tile (2-buf)
                 + 2 * tm * d_out_p * jnp.dtype(out_dtype).itemsize  # out tile
                 + 2 * tm * d_max * 4)                            # live f32 interm.
    needed = weight_bytes + act_bytes
    try:
        vmem_cap = int(pltpu.get_tpu_info().vmem_capacity_bytes)
    except Exception:
        vmem_cap = 64 * 1024 * 1024
    vmem_limit = int(min(vmem_cap * 3 // 4, max(2 * needed, 32 * 1024 * 1024)))
    # TODO(synk): if weight_bytes alone exceeds ~vmem_limit (very wide MLPs on
    # v7x's 64 MiB), stream weights per layer with pltpu.emit_pipeline instead
    # of keeping all layers VMEM-resident.

    out = pl.pallas_call(
        _fused_mlp_kernel,
        out_shape=jax.ShapeDtypeStruct((b_pad, d_out_p), out_dtype),
        grid=grid,
        in_specs=in_specs,
        out_specs=pl.BlockSpec((tm, d_out_p), lambda i: (i, 0)),
        compiler_params=pltpu.CompilerParams(
            dimension_semantics=("parallel",),
            vmem_limit_bytes=vmem_limit,
        ),
    )(x_p, *flat_wb)

    # Slice padded batch rows / padded logit lanes back to the true shape.
    return out[:B, :out_features]


def init_params(key, layer_sizes, dtype=jnp.bfloat16):
    """Deterministic synthetic params, mimicking nn.Linear's uniform init.

    bf16 is the default for the Pallas path (native MXU rate, halved DMA);
    accumulation stays f32 inside the kernel either way.
    """
    params = []
    for fan_in, fan_out in zip(layer_sizes[:-1], layer_sizes[1:]):
        key, kw, kb = jax.random.split(key, 3)
        bound = 1.0 / jnp.sqrt(jnp.float32(fan_in))
        # Stored as (in, out) == PyTorch weight (out, in) transposed.
        w = jax.random.uniform(kw, (fan_in, fan_out), jnp.float32, -bound, bound)
        b = jax.random.uniform(kb, (1, fan_out), jnp.float32, -bound, bound)
        params.append((w.astype(dtype), b.astype(dtype)))
    return params


@jax.jit
def neural_network_forward(x_nchw, params):
    """Pallas implementation of NeuralNetwork.forward.

    nn.Flatten() -> fused (Linear+ReLU)*(L-1) + final Linear, ONE kernel.
    """
    B = x_nchw.shape[0]
    h = x_nchw.reshape(B, -1)  # nn.Flatten()
    return fused_mlp_pallas(h, params)


def _reference_forward(x_nchw, params):
    """Pure-JAX reference with the same mixed-precision cast pattern."""
    h = x_nchw.reshape(x_nchw.shape[0], -1)
    for i, (w, b) in enumerate(params):
        h = jnp.dot(h.astype(w.dtype), w, preferred_element_type=jnp.float32)
        h = h + b.astype(jnp.float32)
        if i != len(params) - 1:
            h = jnp.maximum(h, 0.0)
    return h


if __name__ == "__main__":
    # Small MNIST-like config: 16x16 single-channel images, 2 hidden layers.
    layer_sizes = [256, 128, 64, 10]  # first entry == flattened input size
    batch, channels, spatial = 2, 1, 16
    assert channels * spatial * spatial == layer_sizes[0]

    key = jax.random.PRNGKey(0)
    key, kx = jax.random.split(key)
    x = jax.random.normal(kx, (batch, channels, spatial, spatial), jnp.float32)

    # Default fast path: bf16 weights, f32 accumulation.
    params_bf16 = init_params(key, layer_sizes, dtype=jnp.bfloat16)
    out_bf16 = neural_network_forward(x, params_bf16)
    jax.block_until_ready(out_bf16)
    ref_bf16 = _reference_forward(x, params_bf16)
    assert out_bf16.shape == (batch, layer_sizes[-1])
    assert jnp.allclose(out_bf16, ref_bf16, atol=2e-2, rtol=2e-2)

    # Full-f32 path: tight numerical check against the pure-f32 reference.
    params_f32 = init_params(key, layer_sizes, dtype=jnp.float32)
    out_f32 = neural_network_forward(x, params_f32)
    jax.block_until_ready(out_f32)
    ref_f32 = _reference_forward(x, params_f32)
    assert out_f32.shape == (batch, layer_sizes[-1])
    assert jnp.allclose(out_f32, ref_f32, atol=1e-5, rtol=1e-5)

    print("KERNEL_OK")
</pallas_src>

<mosaic_0001>
module attributes {stable_mosaic.version = 11 : i64} {
  func.func @_fused_mlp_kernel(%arg0: i32, %arg1: memref<8x256xbf16, #tpu.memory_space<vmem>>, %arg2: memref<256x128xbf16, #tpu.memory_space<vmem>>, %arg3: memref<1x128xbf16, #tpu.memory_space<vmem>>, %arg4: memref<128x128xbf16, #tpu.memory_space<vmem>>, %arg5: memref<1x128xbf16, #tpu.memory_space<vmem>>, %arg6: memref<128x128xbf16, #tpu.memory_space<vmem>>, %arg7: memref<1x128xbf16, #tpu.memory_space<vmem>>, %arg8: memref<8x128xf32, #tpu.memory_space<vmem>>) attributes {dimension_semantics = [#tpu.dimension_semantics<parallel>], iteration_bounds = array<i64: 1>, scalar_prefetch = 0 : i64, scratch_operands = 0 : i64, tpu.core_type = #tpu.core_type<tc>, window_params = [{transform_indices = @transform_0, window_bounds = array<i64: 8, 256>}, {pipeline_mode = #tpu.pipeline_mode<synchronous>, transform_indices = @transform_1, window_bounds = array<i64: 256, 128>}, {pipeline_mode = #tpu.pipeline_mode<synchronous>, transform_indices = @transform_2, window_bounds = array<i64: 1, 128>}, {pipeline_mode = #tpu.pipeline_mode<synchronous>, transform_indices = @transform_3, window_bounds = array<i64: 128, 128>}, {pipeline_mode = #tpu.pipeline_mode<synchronous>, transform_indices = @transform_4, window_bounds = array<i64: 1, 128>}, {pipeline_mode = #tpu.pipeline_mode<synchronous>, transform_indices = @transform_5, window_bounds = array<i64: 128, 128>}, {pipeline_mode = #tpu.pipeline_mode<synchronous>, transform_indices = @transform_6, window_bounds = array<i64: 1, 128>}, {transform_indices = @transform_7, window_bounds = array<i64: 8, 128>}]} {
    %c0 = arith.constant 0 : index
    %c0_0 = arith.constant 0 : index
    %0 = vector.load %arg1[%c0, %c0_0] : memref<8x256xbf16, #tpu.memory_space<vmem>>, vector<8x256xbf16>
    %c0_1 = arith.constant 0 : index
    %c0_2 = arith.constant 0 : index
    %1 = vector.load %arg2[%c0_1, %c0_2] : memref<256x128xbf16, #tpu.memory_space<vmem>>, vector<256x128xbf16>
    %cst = arith.constant dense<0.000000e+00> : vector<8x128xf32>
    %2 = tpu.matmul %0, %1, %cst {dimension_numbers = #tpu.dot_dimension_numbers<[1], [0], [0], [1], [0, 0, 1, 1], [], []>} : vector<8x256xbf16>, vector<256x128xbf16>, vector<8x128xf32> -> vector<8x128xf32>
    %c0_3 = arith.constant 0 : index
    %c0_4 = arith.constant 0 : index
    %3 = vector.load %arg3[%c0_3, %c0_4] : memref<1x128xbf16, #tpu.memory_space<vmem>>, vector<1x128xbf16>
    %4 = arith.extf %3 : vector<1x128xbf16> to vector<1x128xf32>
    %5 = vector.broadcast %4 : vector<1x128xf32> to vector<8x128xf32>
    %6 = arith.addf %2, %5 : vector<8x128xf32>
    %cst_5 = arith.constant 0.000000e+00 : f32
    %7 = vector.broadcast %cst_5 : f32 to vector<8x128xf32>
    %8 = arith.maximumf %6, %7 : vector<8x128xf32>
    %9 = arith.truncf %8 : vector<8x128xf32> to vector<8x128xbf16>
    %c0_6 = arith.constant 0 : index
    %c0_7 = arith.constant 0 : index
    %10 = vector.load %arg4[%c0_6, %c0_7] : memref<128x128xbf16, #tpu.memory_space<vmem>>, vector<128x128xbf16>
    %cst_8 = arith.constant dense<0.000000e+00> : vector<8x128xf32>
    %11 = tpu.matmul %9, %10, %cst_8 {dimension_numbers = #tpu.dot_dimension_numbers<[1], [0], [0], [1], [0, 0, 1, 1], [], []>} : vector<8x128xbf16>, vector<128x128xbf16>, vector<8x128xf32> -> vector<8x128xf32>
    %c0_9 = arith.constant 0 : index
    %c0_10 = arith.constant 0 : index
    %12 = vector.load %arg5[%c0_9, %c0_10] : memref<1x128xbf16, #tpu.memory_space<vmem>>, vector<1x128xbf16>
    %13 = arith.extf %12 : vector<1x128xbf16> to vector<1x128xf32>
    %14 = vector.broadcast %13 : vector<1x128xf32> to vector<8x128xf32>
    %15 = arith.addf %11, %14 : vector<8x128xf32>
    %cst_11 = arith.constant 0.000000e+00 : f32
    %16 = vector.broadcast %cst_11 : f32 to vector<8x128xf32>
    %17 = arith.maximumf %15, %16 : vector<8x128xf32>
    %18 = arith.truncf %17 : vector<8x128xf32> to vector<8x128xbf16>
    %c0_12 = arith.constant 0 : index
    %c0_13 = arith.constant 0 : index
    %19 = vector.load %arg6[%c0_12, %c0_13] : memref<128x128xbf16, #tpu.memory_space<vmem>>, vector<128x128xbf16>
    %cst_14 = arith.constant dense<0.000000e+00> : vector<8x128xf32>
    %20 = tpu.matmul %18, %19, %cst_14 {dimension_numbers = #tpu.dot_dimension_numbers<[1], [0], [0], [1], [0, 0, 1, 1], [], []>} : vector<8x128xbf16>, vector<128x128xbf16>, vector<8x128xf32> -> vector<8x128xf32>
    %c0_15 = arith.constant 0 : index
    %c0_16 = arith.constant 0 : index
    %21 = vector.load %arg7[%c0_15, %c0_16] : memref<1x128xbf16, #tpu.memory_space<vmem>>, vector<1x128xbf16>
    %22 = arith.extf %21 : vector<1x128xbf16> to vector<1x128xf32>
    %23 = vector.broadcast %22 : vector<1x128xf32> to vector<8x128xf32>
    %24 = arith.addf %20, %23 : vector<8x128xf32>
    %c0_17 = arith.constant 0 : index
    %c0_18 = arith.constant 0 : index
    %25 = vector.load %arg8[%c0_17, %c0_18] : memref<8x128xf32, #tpu.memory_space<vmem>>, vector<8x128xf32>
    tpu.vector_store %arg8[%c0_17, %c0_18], %24 {strides = array<i32>} : memref<8x128xf32, #tpu.memory_space<vmem>>, vector<8x128xf32>,
    return
  }
  func.func @transform_0(%arg0: i32) -> (i32, i32) {
    %c0_i32 = arith.constant 0 : i32
    %c0_i32_0 = arith.constant 0 : i32
    return %arg0, %c0_i32 : i32, i32
  }
  func.func @transform_1(%arg0: i32) -> (i32, i32) {
    %c0_i32 = arith.constant 0 : i32
    %c0_i32_0 = arith.constant 0 : i32
    %c0_i32_1 = arith.constant 0 : i32
    return %c0_i32, %c0_i32_0 : i32, i32
  }
  func.func @transform_2(%arg0: i32) -> (i32, i32) {
    %c0_i32 = arith.constant 0 : i32
    %c0_i32_0 = arith.constant 0 : i32
    %c0_i32_1 = arith.constant 0 : i32
    return %c0_i32, %c0_i32_0 : i32, i32
  }
  func.func @transform_3(%arg0: i32) -> (i32, i32) {
    %c0_i32 = arith.constant 0 : i32
    %c0_i32_0 = arith.constant 0 : i32
    %c0_i32_1 = arith.constant 0 : i32
    return %c0_i32, %c0_i32_0 : i32, i32
  }
  func.func @transform_4(%arg0: i32) -> (i32, i32) {
    %c0_i32 = arith.constant 0 : i32
    %c0_i32_0 = arith.constant 0 : i32
    %c0_i32_1 = arith.constant 0 : i32
    return %c0_i32, %c0_i32_0 : i32, i32
  }
  func.func @transform_5(%arg0: i32) -> (i32, i32) {
    %c0_i32 = arith.constant 0 : i32
    %c0_i32_0 = arith.constant 0 : i32
    %c0_i32_1 = arith.constant 0 : i32
    return %c0_i32, %c0_i32_0 : i32, i32
  }
  func.func @transform_6(%arg0: i32) -> (i32, i32) {
    %c0_i32 = arith.constant 0 : i32
    %c0_i32_0 = arith.constant 0 : i32
    %c0_i32_1 = arith.constant 0 : i32
    return %c0_i32, %c0_i32_0 : i32, i32
  }
  func.func @transform_7(%arg0: i32) -> (i32, i32) {
    %c0_i32 = arith.constant 0 : i32
    %c0_i32_0 = arith.constant 0 : i32
    return %arg0, %c0_i32 : i32, i32
  }
}

</mosaic_0001>

<llo_original>
// kernel: neural_network_forward.1
$region0: #{neural_network_forward.1}
  #allocation0 [shape = 'u32[]', space=smem, size = 0x4, offset = 0x4, fixed_abs, tag = 'smem constant byte address 0x4 - core index']
  #allocation1 [shape = 'u32[144,128]{1,0:T(1,128)}', space=vmem, size = 0x12000, scoped, tag = 'internal scratch']
  %s0 = inlined_call_operand.vmem [shape: bf16[8,256], index: 0, kind: input, shape index: {}]
  %s1 = inlined_call_operand.vmem [shape: bf16[256,128], index: 1, kind: input, shape index: {}]
  %s2 = inlined_call_operand.vmem [shape: bf16[1,128], index: 2, kind: input, shape index: {}]
  %s3 = inlined_call_operand.vmem [shape: bf16[128,128], index: 3, kind: input, shape index: {}]
  %s4 = inlined_call_operand.vmem [shape: bf16[1,128], index: 4, kind: input, shape index: {}]
  %s5 = inlined_call_operand.vmem [shape: bf16[128,128], index: 5, kind: input, shape index: {}]
  %s6 = inlined_call_operand.vmem [shape: bf16[1,128], index: 6, kind: input, shape index: {}]
  %s7 = inlined_call_operand.vmem [shape: f32[8,128], index: 7, kind: output, shape index: {}]
  %s8 = sld [smem:[#allocation0]]
  $region38: #{neural_network_forward.1} parent=0
    _
  %s10 = ssub.s32 1, %s8
  %s11 = scalar_select 0, %s10, %s8
  // Predicated region
  $region2: #{neural_network_forward.1} parent=0 // pred_check
    _
  $region3: #{neural_network_forward.1} parent=0 // pred_check_branch
    %13 = sbr.rel (0) target = $region5
  $region4: #{neural_network_forward.1} parent=0 // pred_region
    _
  $region5: #{neural_network_forward.1} parent=0 // pred_fallthru
    _
  // Predicated region
  $region6: #{neural_network_forward.1} parent=0 // pred_check
    _
  $region7: #{neural_network_forward.1} parent=0 // pred_check_branch
    %15 = sbr.rel (0) target = $region9
  $region8: #{neural_network_forward.1} parent=0 // pred_region
    _
  $region9: #{neural_network_forward.1} parent=0 // pred_fallthru
    _
  // Predicated region
  $region10: #{neural_network_forward.1} parent=0 // pred_check
    _
  $region11: #{neural_network_forward.1} parent=0 // pred_check_branch
    %17 = sbr.rel (0) target = $region13
  $region12: #{neural_network_forward.1} parent=0 // pred_region
    _
  $region13: #{neural_network_forward.1} parent=0 // pred_fallthru
    _
  // Predicated region
  $region14: #{neural_network_forward.1} parent=0 // pred_check
    _
  $region15: #{neural_network_forward.1} parent=0 // pred_check_branch
    %19 = sbr.rel (0) target = $region17
  $region16: #{neural_network_forward.1} parent=0 // pred_region
    _
  $region17: #{neural_network_forward.1} parent=0 // pred_fallthru
    _
  // Predicated region
  $region18: #{neural_network_forward.1} parent=0 // pred_check
    _
  $region19: #{neural_network_forward.1} parent=0 // pred_check_branch
    %21 = sbr.rel (0) target = $region21
  $region20: #{neural_network_forward.1} parent=0 // pred_region
    _
  $region21: #{neural_network_forward.1} parent=0 // pred_fallthru
    _
  // Predicated region
  $region22: #{neural_network_forward.1} parent=0 // pred_check
    _
  $region23: #{neural_network_forward.1} parent=0 // pred_check_branch
    %23 = sbr.rel (0) target = $region25
  $region24: #{neural_network_forward.1} parent=0 // pred_region
    _
  $region25: #{neural_network_forward.1} parent=0 // pred_fallthru
    _
  // Predicated region
  $region26: #{neural_network_forward.1} parent=0 // pred_check
    _
  $region27: #{neural_network_forward.1} parent=0 // pred_check_branch
    %25 = sbr.rel (0) target = $region29
  $region28: #{neural_network_forward.1} parent=0 // pred_region
    _
  $region29: #{neural_network_forward.1} parent=0 // pred_fallthru
    _
  %v27 = vld [vmem:[%s0] sm:$0xff]
  %v28 = vld [vmem:[%s1] sm:$0xf]
  %v29 = vld [vmem:[%s1 + $0x4] sm:$0xf]
  %v30 = vld [vmem:[%s1 + $0x8] sm:$0xf]
  %v31 = vld [vmem:[%s1 + $0xc] sm:$0xf]
  %v32 = vld [vmem:[%s1 + $0x10] sm:$0xf]
  %v33 = vld [vmem:[%s1 + $0x14] sm:$0xf]
  %v34 = vld [vmem:[%s1 + $0x18] sm:$0xf]
  %v35 = vld [vmem:[%s1 + $0x1c] sm:$0xf]
  %v36 = vld [vmem:[%s1 + $0x20] sm:$0xf]
  %v37 = vld [vmem:[%s1 + $0x24] sm:$0xf]
  %v38 = vld [vmem:[%s1 + $0x28] sm:$0xf]
  %v39 = vld [vmem:[%s1 + $0x2c] sm:$0xf]
  %v40 = vld [vmem:[%s1 + $0x30] sm:$0xf]
  %v41 = vld [vmem:[%s1 + $0x34] sm:$0xf]
  %v42 = vld [vmem:[%s1 + $0x38] sm:$0xf]
  %v43 = vld [vmem:[%s1 + $0x3c] sm:$0xf]
  %v44 = vld [vmem:[%s1 + $0x40] sm:$0xf]
  %v45 = vld [vmem:[%s1 + $0x44] sm:$0xf]
  %v46 = vld [vmem:[%s1 + $0x48] sm:$0xf]
  %v47 = vld [vmem:[%s1 + $0x4c] sm:$0xf]
  %v48 = vld [vmem:[%s1 + $0x50] sm:$0xf]
  %v49 = vld [vmem:[%s1 + $0x54] sm:$0xf]
  %v50 = vld [vmem:[%s1 + $0x58] sm:$0xf]
  %v51 = vld [vmem:[%s1 + $0x5c] sm:$0xf]
  %v52 = vld [vmem:[%s1 + $0x60] sm:$0xf]
  %v53 = vld [vmem:[%s1 + $0x64] sm:$0xf]
  %v54 = vld [vmem:[%s1 + $0x68] sm:$0xf]
  %v55 = vld [vmem:[%s1 + $0x6c] sm:$0xf]
  %v56 = vld [vmem:[%s1 + $0x70] sm:$0xf]
  %v57 = vld [vmem:[%s1 + $0x74] sm:$0xf]
  %v58 = vld [vmem:[%s1 + $0x78] sm:$0xf]
  %v59 = vld [vmem:[%s1 + $0x7c] sm:$0xf]
  %v60 = vld [vmem:[%s2] sm:$0x1]
  %v61 = vunpack.c.l.bf16 %v60
  %v62 = vlaneseq
  %v63 = vshrl.u32 %v62, 7
  %v64 = vsub.s32 0, %v63
  %v65 = vrot.slane %v61, %v64
  %v67 = vunpack.c.l.b16 %v27
  %v68 = vunpack.c.h.b16 %v27
  %v69 = vpack.c.b16 %v67, %v67
  %v70 = vpack.c.b16 %v68, %v68
  %v105 = vunpack.c.l.b16 %v28
  %v106 = vunpack.c.l.b16 %v29
  %v107 = vunpack.c.l.b16 %v30
  %v108 = vunpack.c.l.b16 %v31
  %v109 = vunpack.c.l.b16 %v32
  %v110 = vunpack.c.l.b16 %v33
  %v111 = vunpack.c.l.b16 %v34
  %v112 = vunpack.c.l.b16 %v35
  %v113 = vunpack.c.l.b16 %v36
  %v114 = vunpack.c.l.b16 %v37
  %v115 = vunpack.c.l.b16 %v38
  %v116 = vunpack.c.l.b16 %v39
  %v117 = vunpack.c.l.b16 %v40
  %v118 = vunpack.c.l.b16 %v41
  %v119 = vunpack.c.l.b16 %v42
  %v120 = vunpack.c.l.b16 %v43
  %v121 = vunpack.c.l.b16 %v44
  %v122 = vunpack.c.l.b16 %v45
  %v123 = vunpack.c.l.b16 %v46
  %v124 = vunpack.c.l.b16 %v47
  %v125 = vunpack.c.l.b16 %v48
  %v126 = vunpack.c.l.b16 %v49
  %v127 = vunpack.c.l.b16 %v50
  %v128 = vunpack.c.l.b16 %v51
  %v129 = vunpack.c.l.b16 %v52
  %v130 = vunpack.c.l.b16 %v53
  %v131 = vunpack.c.l.b16 %v54
  %v132 = vunpack.c.l.b16 %v55
  %v133 = vunpack.c.l.b16 %v56
  %v134 = vunpack.c.l.b16 %v57
  %v135 = vunpack.c.l.b16 %v58
  %v136 = vunpack.c.l.b16 %v59
  %v137 = vpack.c.b16 %v106, %v105
  %v138 = vpack.c.b16 %v108, %v107
  %v139 = vpack.c.b16 %v110, %v109
  %v140 = vpack.c.b16 %v112, %v111
  %v141 = vpack.c.b16 %v114, %v113
  %v142 = vpack.c.b16 %v116, %v115
  %v143 = vpack.c.b16 %v118, %v117
  %v144 = vpack.c.b16 %v120, %v119
  %v145 = vpack.c.b16 %v122, %v121
  %v146 = vpack.c.b16 %v124, %v123
  %v147 = vpack.c.b16 %v126, %v125
  %v148 = vpack.c.b16 %v128, %v127
  %v149 = vpack.c.b16 %v130, %v129
  %v150 = vpack.c.b16 %v132, %v131
  %v151 = vpack.c.b16 %v134, %v133
  %v152 = vpack.c.b16 %v136, %v135
  %169 = vmatprep.subr.bf16.mxu0 0
  %170 = vmatpush1.bf16.msra.mxu0 %v137
  %171 = vmatprep.subr.bf16.mxu0 0
  %172 = vmatpush1.bf16.msra.mxu0 %v138
  %173 = vmatprep.subr.bf16.mxu0 0
  %174 = vmatpush1.bf16.msra.mxu0 %v139
  %175 = vmatprep.subr.bf16.mxu0 0
  %176 = vmatpush1.bf16.msra.mxu0 %v140
  %177 = vmatprep.subr.bf16.mxu0 0
  %178 = vmatpush1.bf16.msra.mxu0 %v141
  %179 = vmatprep.subr.bf16.mxu0 0
  %180 = vmatpush1.bf16.msra.mxu0 %v142
  %181 = vmatprep.subr.bf16.mxu0 0
  %182 = vmatpush1.bf16.msra.mxu0 %v143
  %183 = vmatprep.subr.bf16.mxu0 0
  %184 = vmatpush1.bf16.msra.mxu0 %v144
  %185 = vmatprep.subr.bf16.mxu0 0
  %186 = vmatpush1.bf16.msra.mxu0 %v145
  %187 = vmatprep.subr.bf16.mxu0 0
  %188 = vmatpush1.bf16.msra.mxu0 %v146
  %189 = vmatprep.subr.bf16.mxu0 0
  %190 = vmatpush1.bf16.msra.mxu0 %v147
  %191 = vmatprep.subr.bf16.mxu0 0
  %192 = vmatpush1.bf16.msra.mxu0 %v148
  %193 = vmatprep.subr.bf16.mxu0 0
  %194 = vmatpush1.bf16.msra.mxu0 %v149
  %195 = vmatprep.subr.bf16.mxu0 0
  %196 = vmatpush1.bf16.msra.mxu0 %v150
  %197 = vmatprep.subr.bf16.mxu0 0
  %198 = vmatpush1.bf16.msra.mxu0 %v151
  %199 = vmatprep.subr.bf16.mxu0 0
  %200 = vmatpush1.bf16.msra.mxu0 %v152
  %201 = vmatprep.mubr.bf16.mxu0 %v70
  %202 = vmatmul.mubr.bf16.gmra.mrb[0].mxu0 %v69
  %v203 = vpop.f32.mrb[0].mxu0
  %v204 = vadd.f32 %v65, %v203
  %v205 = vpop.f32.mrb[0].mxu0
  %v206 = vpop.f32.mrb[0].mxu0
  %v207 = vpop.f32.mrb[0].mxu0
  %208 = vdwg.mxu0
  %v209 = vmax.f32 %v204, 0.0
  %v210 = vpack.c.bf16 %v209, %v209
  %v211 = vld [vmem:[%s3] sm:$0xf]
  %v212 = vld [vmem:[%s3 + $0x4] sm:$0xf]
  %v213 = vld [vmem:[%s3 + $0x8] sm:$0xf]
  %v214 = vld [vmem:[%s3 + $0xc] sm:$0xf]
  %v215 = vld [vmem:[%s3 + $0x10] sm:$0xf]
  %v216 = vld [vmem:[%s3 + $0x14] sm:$0xf]
  %v217 = vld [vmem:[%s3 + $0x18] sm:$0xf]
  %v218 = vld [vmem:[%s3 + $0x1c] sm:$0xf]
  %v219 = vld [vmem:[%s3 + $0x20] sm:$0xf]
  %v220 = vld [vmem:[%s3 + $0x24] sm:$0xf]
  %v221 = vld [vmem:[%s3 + $0x28] sm:$0xf]
  %v222 = vld [vmem:[%s3 + $0x2c] sm:$0xf]
  %v223 = vld [vmem:[%s3 + $0x30] sm:$0xf]
  %v224 = vld [vmem:[%s3 + $0x34] sm:$0xf]
  %v225 = vld [vmem:[%s3 + $0x38] sm:$0xf]
  %v226 = vld [vmem:[%s3 + $0x3c] sm:$0xf]
  %v227 = vld [vmem:[%s4] sm:$0x1]
  %v228 = vunpack.c.l.bf16 %v227
  %v229 = vlaneseq
  %v230 = vshrl.u32 %v229, 7
  %v231 = vsub.s32 0, %v230
  %v232 = vrot.slane %v228, %v231
  %v249 = vunpack.c.l.b16 %v211
  %v250 = vunpack.c.l.b16 %v212
  %v251 = vunpack.c.l.b16 %v213
  %v252 = vunpack.c.l.b16 %v214
  %v253 = vunpack.c.l.b16 %v215
  %v254 = vunpack.c.l.b16 %v216
  %v255 = vunpack.c.l.b16 %v217
  %v256 = vunpack.c.l.b16 %v218
  %v257 = vunpack.c.l.b16 %v219
  %v258 = vunpack.c.l.b16 %v220
  %v259 = vunpack.c.l.b16 %v221
  %v260 = vunpack.c.l.b16 %v222
  %v261 = vunpack.c.l.b16 %v223
  %v262 = vunpack.c.l.b16 %v224
  %v263 = vunpack.c.l.b16 %v225
  %v264 = vunpack.c.l.b16 %v226
  %v265 = vpack.c.b16 %v250, %v249
  %v266 = vpack.c.b16 %v252, %v251
  %v267 = vpack.c.b16 %v254, %v253
  %v268 = vpack.c.b16 %v256, %v255
  %v269 = vpack.c.b16 %v258, %v257
  %v270 = vpack.c.b16 %v260, %v259
  %v271 = vpack.c.b16 %v262, %v261
  %v272 = vpack.c.b16 %v264, %v263
  %281 = vmatprep.subr.bf16.mxu0 0
  %282 = vmatpush1.bf16.msra.mxu0 %v265
  %283 = vmatprep.subr.bf16.mxu0 0
  %284 = vmatpush1.bf16.msra.mxu0 %v266
  %285 = vmatprep.subr.bf16.mxu0 0
  %286 = vmatpush1.bf16.msra.mxu0 %v267
  %287 = vmatprep.subr.bf16.mxu0 0
  %288 = vmatpush1.bf16.msra.mxu0 %v268
  %289 = vmatprep.subr.bf16.mxu0 0
  %290 = vmatpush1.bf16.msra.mxu0 %v269
  %291 = vmatprep.subr.bf16.mxu0 0
  %292 = vmatpush1.bf16.msra.mxu0 %v270
  %293 = vmatprep.subr.bf16.mxu0 0
  %294 = vmatpush1.bf16.msra.mxu0 %v271
  %295 = vmatprep.subr.bf16.mxu0 0
  %296 = vmatpush1.bf16.msra.mxu0 %v272
  %297 = vmatprep.subr.bf16.mxu0 0
  %298 = vmatpush1.bf16.msra.mxu0 0
  %299 = vmatprep.subr.bf16.mxu0 0
  %300 = vmatpush1.bf16.msra.mxu0 0
  %301 = vmatprep.subr.bf16.mxu0 0
  %302 = vmatpush1.bf16.msra.mxu0 0
  %303 = vmatprep.subr.bf16.mxu0 0
  %304 = vmatpush1.bf16.msra.mxu0 0
  %305 = vmatprep.subr.bf16.mxu0 0
  %306 = vmatpush1.bf16.msra.mxu0 0
  %307 = vmatprep.subr.bf16.mxu0 0
  %308 = vmatpush1.bf16.msra.mxu0 0
  %309 = vmatprep.subr.bf16.mxu0 0
  %310 = vmatpush1.bf16.msra.mxu0 0
  %311 = vmatprep.subr.bf16.mxu0 0
  %312 = vmatpush1.bf16.msra.mxu0 0
  %313 = vmatprep.mubr.bf16.mxu0 0
  %314 = vmatmul.mubr.bf16.gmra.mrb[0].mxu0 %v210
  %v315 = vpop.f32.mrb[0].mxu0
  %v316 = vadd.f32 %v232, %v315
  %v317 = vpop.f32.mrb[0].mxu0
  %v318 = vpop.f32.mrb[0].mxu0
  %v319 = vpop.f32.mrb[0].mxu0
  %320 = vdwg.mxu0
  %v321 = vmax.f32 %v316, 0.0
  %v322 = vpack.c.bf16 %v321, %v321
  %v323 = vld [vmem:[%s5] sm:$0xf]
  %v324 = vld [vmem:[%s5 + $0x4] sm:$0xf]
  %v325 = vld [vmem:[%s5 + $0x8] sm:$0xf]
  %v326 = vld [vmem:[%s5 + $0xc] sm:$0xf]
  %v327 = vld [vmem:[%s5 + $0x10] sm:$0xf]
  %v328 = vld [vmem:[%s5 + $0x14] sm:$0xf]
  %v329 = vld [vmem:[%s5 + $0x18] sm:$0xf]
  %v330 = vld [vmem:[%s5 + $0x1c] sm:$0xf]
  %v331 = vld [vmem:[%s5 + $0x20] sm:$0xf]
  %v332 = vld [vmem:[%s5 + $0x24] sm:$0xf]
  %v333 = vld [vmem:[%s5 + $0x28] sm:$0xf]
  %v334 = vld [vmem:[%s5 + $0x2c] sm:$0xf]
  %v335 = vld [vmem:[%s5 + $0x30] sm:$0xf]
  %v336 = vld [vmem:[%s5 + $0x34] sm:$0xf]
  %v337 = vld [vmem:[%s5 + $0x38] sm:$0xf]
  %v338 = vld [vmem:[%s5 + $0x3c] sm:$0xf]
  %v339 = vld [vmem:[%s6] sm:$0x1]
  %v340 = vunpack.c.l.bf16 %v339
  %v341 = vlaneseq
  %v342 = vshrl.u32 %v341, 7
  %v343 = vsub.s32 0, %v342
  %v344 = vrot.slane %v340, %v343
  %v361 = vunpack.c.l.b16 %v323
  %v362 = vunpack.c.l.b16 %v324
  %v363 = vunpack.c.l.b16 %v325
  %v364 = vunpack.c.l.b16 %v326
  %v365 = vunpack.c.l.b16 %v327
  %v366 = vunpack.c.l.b16 %v328
  %v367 = vunpack.c.l.b16 %v329
  %v368 = vunpack.c.l.b16 %v330
  %v369 = vunpack.c.l.b16 %v331
  %v370 = vunpack.c.l.b16 %v332
  %v371 = vunpack.c.l.b16 %v333
  %v372 = vunpack.c.l.b16 %v334
  %v373 = vunpack.c.l.b16 %v335
  %v374 = vunpack.c.l.b16 %v336
  %v375 = vunpack.c.l.b16 %v337
  %v376 = vunpack.c.l.b16 %v338
  %v377 = vpack.c.b16 %v362, %v361
  %v378 = vpack.c.b16 %v364, %v363
  %v379 = vpack.c.b16 %v366, %v365
  %v380 = vpack.c.b16 %v368, %v367
  %v381 = vpack.c.b16 %v370, %v369
  %v382 = vpack.c.b16 %v372, %v371
  %v383 = vpack.c.b16 %v374, %v373
  %v384 = vpack.c.b16 %v376, %v375
  %393 = vmatprep.subr.bf16.mxu0 0
  %394 = vmatpush1.bf16.msra.mxu0 %v377
  %395 = vmatprep.subr.bf16.mxu0 0
  %396 = vmatpush1.bf16.msra.mxu0 %v378
  %397 = vmatprep.subr.bf16.mxu0 0
  %398 = vmatpush1.bf16.msra.mxu0 %v379
  %399 = vmatprep.subr.bf16.mxu0 0
  %400 = vmatpush1.bf16.msra.mxu0 %v380
  %401 = vmatprep.subr.bf16.mxu0 0
  %402 = vmatpush1.bf16.msra.mxu0 %v381
  %403 = vmatprep.subr.bf16.mxu0 0
  %404 = vmatpush1.bf16.msra.mxu0 %v382
  %405 = vmatprep.subr.bf16.mxu0 0
  %406 = vmatpush1.bf16.msra.mxu0 %v383
  %407 = vmatprep.subr.bf16.mxu0 0
  %408 = vmatpush1.bf16.msra.mxu0 %v384
  %409 = vmatprep.subr.bf16.mxu0 0
  %410 = vmatpush1.bf16.msra.mxu0 0
  %411 = vmatprep.subr.bf16.mxu0 0
  %412 = vmatpush1.bf16.msra.mxu0 0
  %413 = vmatprep.subr.bf16.mxu0 0
  %414 = vmatpush1.bf16.msra.mxu0 0
  %415 = vmatprep.subr.bf16.mxu0 0
  %416 = vmatpush1.bf16.msra.mxu0 0
  %417 = vmatprep.subr.bf16.mxu0 0
  %418 = vmatpush1.bf16.msra.mxu0 0
  %419 = vmatprep.subr.bf16.mxu0 0
  %420 = vmatpush1.bf16.msra.mxu0 0
  %421 = vmatprep.subr.bf16.mxu0 0
  %422 = vmatpush1.bf16.msra.mxu0 0
  %423 = vmatprep.subr.bf16.mxu0 0
  %424 = vmatpush1.bf16.msra.mxu0 0
  %425 = vmatprep.mubr.bf16.mxu0 0
  %426 = vmatmul.mubr.bf16.gmra.mrb[0].mxu0 %v322
  %v427 = vpop.f32.mrb[0].mxu0
  %v428 = vadd.f32 %v344, %v427
  %v429 = vpop.f32.mrb[0].mxu0
  %v430 = vpop.f32.mrb[0].mxu0
  %v431 = vpop.f32.mrb[0].mxu0
  %432 = vdwg.mxu0
  %433 = vst [vmem:[%s7] sm:$0xff] %v428
  // Predicated region
  $region30: #{neural_network_forward.1} parent=0 // pred_check
    _
  $region31: #{neural_network_forward.1} parent=0 // pred_check_branch
    %435 = sbr.rel (0) target = $region33
  $region32: #{neural_network_forward.1} parent=0 // pred_region
    _
  $region33: #{neural_network_forward.1} parent=0 // pred_fallthru
    _
  // Predicated region
  $region34: #{neural_network_forward.1} parent=0 // pred_check
    _
  $region35: #{neural_network_forward.1} parent=0 // pred_check_branch
    %437 = sbr.rel (0) target = $region37
  $region36: #{neural_network_forward.1} parent=0 // pred_region
    _
  $region37: #{neural_network_forward.1} parent=0 // pred_fallthru
    _

</llo_original>
